<compile_context>
chip_gen: v6e
topology: v6e:2x2x1
jax: 0.10.0
libtpu: 0.0.40
codegen_flags: <defaults>
</compile_context>

<pallas_src>
import math
import numpy as np
import jax
import jax.numpy as jnp
from jax.experimental import pallas as pl
from jax.experimental.pallas import tpu as pltpu

LANE = 128  # lane tile (last-dim alignment for dense loads / MXU passes)


def calc_coeff(iter_num, high=1.0, low=0.0, alpha=10.0, max_iter=10000.0):
    return float(2.0 * (high - low) / (1.0 + np.exp(-alpha * iter_num / max_iter))
                 - (high - low) + low)


def _round_up(v, m):
    return ((v + m - 1) // m) * m


def _vmem_capacity_bytes():
    try:
        info = pltpu.get_tpu_info()
        cap = getattr(info, "vmem_capacity_bytes", None)
        if cap:
            return int(cap)
    except Exception:
        pass
    return 64 * 2**20  # conservative fallback: v7x per-TensorCore VMEM


def _adv_net_kernel(x_ref, w1_ref, b1_ref, w2_ref, b2_ref, w3_ref, b3_ref, y_ref):
    """Fused 3-layer MLP on one batch tile: matmul->relu->matmul->relu->matvec->sigmoid."""
    x = x_ref[...]

    # ad_layer1 + relu1 (dropout1 identity in eval mode). bf16 operands, f32 accumulation.
    h1 = jnp.dot(x, w1_ref[...], preferred_element_type=jnp.float32) + b1_ref[...]
    h1 = jnp.maximum(h1, 0.0)

    # ad_layer2 + relu2 (dropout2 identity in eval mode).
    h2 = jnp.dot(h1.astype(w2_ref.dtype), w2_ref[...],
                 preferred_element_type=jnp.float32) + b2_ref[...]
    h2 = jnp.maximum(h2, 0.0)

    # ad_layer3 (output width 1): compute it as (1,H) x (TB,H)^T -> (1,TB) so the result
    # is already lane-major (contiguous row store, 4 B/row writeback) — one cheap MXU pass.
    logits = jax.lax.dot_general(
        w3_ref[...], h2.astype(w3_ref.dtype),
        dimension_numbers=(((1,), (1,)), ((), ())),
        preferred_element_type=jnp.float32) + b3_ref[0, 0]

    # Numerically stable sigmoid: exp on the EUP, exact reciprocal, select.
    z = jnp.exp(-jnp.abs(logits))
    inv = pl.reciprocal(1.0 + z)                      # exact (approx=False)
    sig = jnp.where(logits >= 0.0, inv, z * inv)      # (1, TB)

    y_ref[...] = sig[None].astype(y_ref.dtype)        # (1, 1, TB) lane-dense row store

    # TODO(synk): training-mode dropout (p=0.5 via pltpu.prng_*) and the gradient-reversal
    # hook (backward-only) are not represented in this forward-only kernel.


def adversarial_network_forward(x, params, iter_num=0, training=False,
                                block_batch=1024, compute_dtype=jnp.bfloat16):
    """Computes the GRL coeff (backward-only schedule), pads/casts operands, runs the
    fused kernel and returns sigmoid probabilities of shape (B, 1) in float32."""
    if training:
        iter_num += 1
    _coeff = calc_coeff(iter_num, 1.0, 0.0, 10.0, 10000.0)  # forward-inert (GRL schedule)

    w1, b1, w2, b2, w3_row, b3 = params
    B, in_feature = x.shape
    hidden = w1.shape[1]

    comp = jnp.dtype(compute_dtype)
    sublane = {4: 8, 2: 16, 1: 32}.get(comp.itemsize, 8)

    # ---- pad feature dims to lane multiples (zero padding is forward-exact) ----
    in_p = _round_up(in_feature, LANE)
    hid_p = _round_up(hidden, LANE)

    w1_c = jnp.pad(w1.astype(comp), ((0, in_p - in_feature), (0, hid_p - hidden)))
    w2_c = jnp.pad(w2.astype(comp), ((0, hid_p - hidden), (0, hid_p - hidden)))
    w3_c = jnp.pad(w3_row.astype(comp), ((0, 0), (0, hid_p - hidden)))
    b1_c = jnp.pad(b1.astype(jnp.float32).reshape(1, -1), ((0, 0), (0, hid_p - hidden)))
    b2_c = jnp.pad(b2.astype(jnp.float32).reshape(1, -1), ((0, 0), (0, hid_p - hidden)))
    b3_c = b3.astype(jnp.float32).reshape(1, 1)

    # ---- batch tile from per-generation VMEM budget; >=2 grid steps for v7x megacore ----
    weight_bytes = (in_p * hid_p + hid_p * hid_p + hid_p) * comp.itemsize + 2 * hid_p * 4
    cap = _vmem_capacity_bytes()
    budget = int(cap * 0.7)
    per_row = (2 * in_p * comp.itemsize      # double-buffered input tile
               + 2 * 4                       # double-buffered (1, TB) f32 output row
               + 4 * hid_p * 4)              # f32 h1/h2 temporaries + cast copies
    # TODO(synk): fall back to a K-tiled scheme if the resident weights alone exceed VMEM.
    tb_cap = (budget - 2 * weight_bytes) // per_row
    tb_cap = int(max(sublane, min(tb_cap, block_batch)))

    n_tiles = max(1, -(-B // tb_cap))
    if n_tiles == 1 and B >= 2 * sublane:
        n_tiles = 2                          # let ("parallel",) shard across the two v7x TCs
    tb = _round_up(-(-B // n_tiles), sublane)
    b_pad = n_tiles * tb

    x_c = jnp.pad(x.astype(comp), ((0, b_pad - B), (0, in_p - in_feature)))

    # ---- honest VMEM limit & cost estimate ----
    needed = 2 * weight_bytes + tb * per_row + (4 << 20)
    vmem_limit = int(min(cap, max(needed, 32 * 2**20)))

    flops = 2 * b_pad * (in_p * hid_p + hid_p * hid_p + hid_p)
    bytes_accessed = b_pad * in_p * comp.itemsize + weight_bytes + b_pad * 4
    cost = pl.CostEstimate(flops=int(flops), transcendentals=int(b_pad),
                           bytes_accessed=int(bytes_accessed))

    const = lambda i: (0, 0)  # weights/biases: same block every step -> VMEM-resident

    def _run(single_buffer_weights):
        wkw = {"pipeline_mode": pl.Buffered(1)} if single_buffer_weights else {}
        in_specs = [
            pl.BlockSpec((tb, in_p), lambda i: (i, 0)),            # x batch tile
            pl.BlockSpec((in_p, hid_p), const, **wkw),             # W1 (resident)
            pl.BlockSpec((1, hid_p), const, **wkw),                # b1
            pl.BlockSpec((hid_p, hid_p), const, **wkw),            # W2
            pl.BlockSpec((1, hid_p), const, **wkw),                # b2
            pl.BlockSpec((1, hid_p), const, **wkw),                # w3 (row)
            pl.BlockSpec(memory_space=pltpu.MemorySpace.SMEM),     # b3 scalar in SMEM
        ]
        return pl.pallas_call(
            _adv_net_kernel,
            out_shape=jax.ShapeDtypeStruct((n_tiles, 1, tb), jnp.float32),
            grid=(n_tiles,),
            in_specs=in_specs,
            out_specs=pl.BlockSpec((1, 1, tb), lambda i: (i, 0, 0)),
            compiler_params=pltpu.CompilerParams(
                dimension_semantics=("parallel",),
                vmem_limit_bytes=vmem_limit,
            ),
            cost_estimate=cost,
        )(x_c, w1_c, b1_c, w2_c, b2_c, w3_c, b3_c)

    try:
        out = _run(True)       # single-buffered resident weights (smaller VMEM footprint)
    except Exception:
        out = _run(False)      # fallback: default double-buffered specs

    return out.reshape(-1)[:B].reshape(B, 1)


def init_params(key, in_feature, hidden_size):
    """Xavier-normal weights, zero biases (matching the nn.Module init).
    W1/W2 stored as [in, out] (transpose of PyTorch); W3 as a (1, hidden) row."""
    k1, k2, k3 = jax.random.split(key, 3)

    def xavier_normal(k, fan_in, fan_out):
        std = math.sqrt(2.0 / (fan_in + fan_out))
        return std * jax.random.normal(k, (fan_in, fan_out), dtype=jnp.float32)

    w1 = xavier_normal(k1, in_feature, hidden_size)
    b1 = jnp.zeros((1, hidden_size), jnp.float32)
    w2 = xavier_normal(k2, hidden_size, hidden_size)
    b2 = jnp.zeros((1, hidden_size), jnp.float32)
    w3_row = jnp.transpose(xavier_normal(k3, hidden_size, 1))  # ad_layer3.weight is [1, hidden]
    b3 = jnp.zeros((1, 1), jnp.float32)
    return (w1, b1, w2, b2, w3_row, b3)


def _reference_forward(x, params, compute_dtype):
    """Pure-JAX reference matching the kernel's numerics (compute-dtype operands, f32 acc)."""
    w1, b1, w2, b2, w3_row, b3 = params
    comp = jnp.dtype(compute_dtype)
    h1 = jnp.maximum(jnp.dot(x.astype(comp), w1.astype(comp),
                             preferred_element_type=jnp.float32) + b1, 0.0)
    h2 = jnp.maximum(jnp.dot(h1.astype(comp), w2.astype(comp),
                             preferred_element_type=jnp.float32) + b2, 0.0)
    logits = jnp.dot(h2.astype(comp), w3_row.astype(comp).T,
                     preferred_element_type=jnp.float32) + b3
    return jax.nn.sigmoid(logits)


if __name__ == "__main__":
    key = jax.random.PRNGKey(0)
    k_x, k_p = jax.random.split(key)

    batch, in_feature, hidden_size = 8, 32, 32
    x = jax.random.normal(k_x, (batch, in_feature), dtype=jnp.float32)
    params = init_params(k_p, in_feature, hidden_size)

    # Default production path: bf16 operands, f32 accumulation.
    y_bf16 = adversarial_network_forward(x, params, iter_num=0, training=False)
    y_bf16 = jax.block_until_ready(y_bf16)
    y_ref_bf16 = _reference_forward(x, params, jnp.bfloat16)
    assert y_bf16.shape == (batch, 1)
    assert bool(jnp.all(jnp.isfinite(y_bf16)))
    assert jnp.allclose(y_bf16, y_ref_bf16, atol=2e-2), "bf16 mismatch vs JAX reference"

    # f32 path: tight check against the pure-JAX reference.
    y_f32 = adversarial_network_forward(x, params, compute_dtype=jnp.float32)
    y_f32 = jax.block_until_ready(y_f32)
    y_ref_f32 = _reference_forward(x, params, jnp.float32)
    assert jnp.allclose(y_f32, y_ref_f32, atol=2e-5, rtol=1e-5), "f32 mismatch vs JAX reference"

    print("KERNEL_OK")
</pallas_src>

<mosaic_0001>
module attributes {stable_mosaic.version = 11 : i64} {
  func.func @_adv_net_kernel(%arg0: i32, %arg1: memref<16x128xbf16, #tpu.memory_space<vmem>>, %arg2: memref<128x128xbf16, #tpu.memory_space<vmem>>, %arg3: memref<1x128xf32, #tpu.memory_space<vmem>>, %arg4: memref<128x128xbf16, #tpu.memory_space<vmem>>, %arg5: memref<1x128xf32, #tpu.memory_space<vmem>>, %arg6: memref<1x128xbf16, #tpu.memory_space<vmem>>, %arg7: memref<1x1xf32, #tpu.memory_space<smem>>, %arg8: memref<1x1x16xf32, #tpu.memory_space<vmem>>) attributes {dimension_semantics = [#tpu.dimension_semantics<parallel>], iteration_bounds = array<i64: 1>, scalar_prefetch = 0 : i64, scratch_operands = 0 : i64, tpu.core_type = #tpu.core_type<tc>, window_params = [{transform_indices = @transform_0, window_bounds = array<i64: 16, 128>}, {pipeline_mode = #tpu.pipeline_mode<synchronous>, transform_indices = @transform_1, window_bounds = array<i64: 128, 128>}, {pipeline_mode = #tpu.pipeline_mode<synchronous>, transform_indices = @transform_2, window_bounds = array<i64: 1, 128>}, {pipeline_mode = #tpu.pipeline_mode<synchronous>, transform_indices = @transform_3, window_bounds = array<i64: 128, 128>}, {pipeline_mode = #tpu.pipeline_mode<synchronous>, transform_indices = @transform_4, window_bounds = array<i64: 1, 128>}, {pipeline_mode = #tpu.pipeline_mode<synchronous>, transform_indices = @transform_5, window_bounds = array<i64: 1, 128>}, {transform_indices = @transform_6, window_bounds = array<i64: 1, 1>}, {transform_indices = @transform_7, window_bounds = array<i64: 1, 1, 16>}]} {
    %c0 = arith.constant 0 : index
    %c0_0 = arith.constant 0 : index
    %0 = vector.load %arg1[%c0, %c0_0] : memref<16x128xbf16, #tpu.memory_space<vmem>>, vector<16x128xbf16>
    %c0_1 = arith.constant 0 : index
    %c0_2 = arith.constant 0 : index
    %1 = vector.load %arg2[%c0_1, %c0_2] : memref<128x128xbf16, #tpu.memory_space<vmem>>, vector<128x128xbf16>
    %cst = arith.constant dense<0.000000e+00> : vector<16x128xf32>
    %2 = tpu.matmul %0, %1, %cst {dimension_numbers = #tpu.dot_dimension_numbers<[1], [0], [0], [1], [0, 0, 1, 1], [], []>} : vector<16x128xbf16>, vector<128x128xbf16>, vector<16x128xf32> -> vector<16x128xf32>
    %c0_3 = arith.constant 0 : index
    %c0_4 = arith.constant 0 : index
    %3 = vector.load %arg3[%c0_3, %c0_4] : memref<1x128xf32, #tpu.memory_space<vmem>>, vector<1x128xf32>
    %4 = vector.broadcast %3 : vector<1x128xf32> to vector<16x128xf32>
    %5 = arith.addf %2, %4 : vector<16x128xf32>
    %cst_5 = arith.constant 0.000000e+00 : f32
    %6 = vector.broadcast %cst_5 : f32 to vector<16x128xf32>
    %7 = arith.maximumf %5, %6 : vector<16x128xf32>
    %8 = arith.truncf %7 : vector<16x128xf32> to vector<16x128xbf16>
    %c0_6 = arith.constant 0 : index
    %c0_7 = arith.constant 0 : index
    %9 = vector.load %arg4[%c0_6, %c0_7] : memref<128x128xbf16, #tpu.memory_space<vmem>>, vector<128x128xbf16>
    %cst_8 = arith.constant dense<0.000000e+00> : vector<16x128xf32>
    %10 = tpu.matmul %8, %9, %cst_8 {dimension_numbers = #tpu.dot_dimension_numbers<[1], [0], [0], [1], [0, 0, 1, 1], [], []>} : vector<16x128xbf16>, vector<128x128xbf16>, vector<16x128xf32> -> vector<16x128xf32>
    %c0_9 = arith.constant 0 : index
    %c0_10 = arith.constant 0 : index
    %11 = vector.load %arg5[%c0_9, %c0_10] : memref<1x128xf32, #tpu.memory_space<vmem>>, vector<1x128xf32>
    %12 = vector.broadcast %11 : vector<1x128xf32> to vector<16x128xf32>
    %13 = arith.addf %10, %12 : vector<16x128xf32>
    %cst_11 = arith.constant 0.000000e+00 : f32
    %14 = vector.broadcast %cst_11 : f32 to vector<16x128xf32>
    %15 = arith.maximumf %13, %14 : vector<16x128xf32>
    %c0_12 = arith.constant 0 : index
    %c0_13 = arith.constant 0 : index
    %16 = vector.load %arg6[%c0_12, %c0_13] : memref<1x128xbf16, #tpu.memory_space<vmem>>, vector<1x128xbf16>
    %17 = arith.truncf %15 : vector<16x128xf32> to vector<16x128xbf16>
    %cst_14 = arith.constant dense<0.000000e+00> : vector<1x16xf32>
    %18 = tpu.matmul %16, %17, %cst_14 {dimension_numbers = #tpu.dot_dimension_numbers<[1], [1], [0], [0], [0, 0, 1, 0], [], []>} : vector<1x128xbf16>, vector<16x128xbf16>, vector<1x16xf32> -> vector<1x16xf32>
    %c0_15 = arith.constant 0 : index
    %c0_16 = arith.constant 0 : index
    %19 = memref.load %arg7[%c0_15, %c0_16] : memref<1x1xf32, #tpu.memory_space<smem>>
    %20 = vector.broadcast %19 : f32 to vector<1x16xf32>
    %21 = arith.addf %18, %20 : vector<1x16xf32>
    %22 = math.absf %21 : vector<1x16xf32>
    %cst_17 = arith.constant 0.000000e+00 : f32
    %23 = vector.broadcast %cst_17 : f32 to vector<1x16xf32>
    %24 = arith.subf %23, %22 : vector<1x16xf32>
    %25 = math.exp %24 : vector<1x16xf32>
    %cst_18 = arith.constant 1.000000e+00 : f32
    %26 = vector.broadcast %cst_18 : f32 to vector<1x16xf32>
    %27 = arith.addf %26, %25 : vector<1x16xf32>
    %28 = tpu.reciprocal %27 : vector<1x16xf32> -> vector<1x16xf32>
    %cst_19 = arith.constant 0.000000e+00 : f32
    %29 = vector.broadcast %cst_19 : f32 to vector<1x16xf32>
    %30 = arith.cmpf oge, %21, %29 : vector<1x16xf32>
    %31 = arith.mulf %25, %28 : vector<1x16xf32>
    %32 = arith.select %30, %28, %31 : vector<1x16xi1>, vector<1x16xf32>
    %33 = vector.shape_cast %32 : vector<1x16xf32> to vector<1x1x16xf32>
    %c0_20 = arith.constant 0 : index
    %c0_21 = arith.constant 0 : index
    %c0_22 = arith.constant 0 : index
    %34 = vector.load %arg8[%c0_20, %c0_21, %c0_22] : memref<1x1x16xf32, #tpu.memory_space<vmem>>, vector<1x1x16xf32>
    tpu.vector_store %arg8[%c0_20, %c0_21, %c0_22], %33 {strides = array<i32>} : memref<1x1x16xf32, #tpu.memory_space<vmem>>, vector<1x1x16xf32>,
    return
  }
  func.func @transform_0(%arg0: i32) -> (i32, i32) {
    %c0_i32 = arith.constant 0 : i32
    %c0_i32_0 = arith.constant 0 : i32
    return %arg0, %c0_i32 : i32, i32
  }
  func.func @transform_1(%arg0: i32) -> (i32, i32) {
    %c0_i32 = arith.constant 0 : i32
    %c0_i32_0 = arith.constant 0 : i32
    %c0_i32_1 = arith.constant 0 : i32
    return %c0_i32, %c0_i32_0 : i32, i32
  }
  func.func @transform_2(%arg0: i32) -> (i32, i32) {
    %c0_i32 = arith.constant 0 : i32
    %c0_i32_0 = arith.constant 0 : i32
    %c0_i32_1 = arith.constant 0 : i32
    return %c0_i32, %c0_i32_0 : i32, i32
  }
  func.func @transform_3(%arg0: i32) -> (i32, i32) {
    %c0_i32 = arith.constant 0 : i32
    %c0_i32_0 = arith.constant 0 : i32
    %c0_i32_1 = arith.constant 0 : i32
    return %c0_i32, %c0_i32_0 : i32, i32
  }
  func.func @transform_4(%arg0: i32) -> (i32, i32) {
    %c0_i32 = arith.constant 0 : i32
    %c0_i32_0 = arith.constant 0 : i32
    %c0_i32_1 = arith.constant 0 : i32
    return %c0_i32, %c0_i32_0 : i32, i32
  }
  func.func @transform_5(%arg0: i32) -> (i32, i32) {
    %c0_i32 = arith.constant 0 : i32
    %c0_i32_0 = arith.constant 0 : i32
    %c0_i32_1 = arith.constant 0 : i32
    return %c0_i32, %c0_i32_0 : i32, i32
  }
  func.func @transform_6(%arg0: i32) -> (i32, i32) {
    %c0_i32 = arith.constant 0 : i32
    %c0_i32_0 = arith.constant 0 : i32
    %c0_i32_1 = arith.constant 0 : i32
    return %c0_i32, %c0_i32_0 : i32, i32
  }
  func.func @transform_7(%arg0: i32) -> (i32, i32, i32) {
    %c0_i32 = arith.constant 0 : i32
    %c0_i32_0 = arith.constant 0 : i32
    %c0_i32_1 = arith.constant 0 : i32
    return %arg0, %c0_i32, %c0_i32_0 : i32, i32, i32
  }
}

module attributes {stable_mosaic.version = 11 : i64} {
  func.func @_adv_net_kernel(%arg0: i32, %arg1: memref<16x128xbf16, #tpu.memory_space<vmem>>, %arg2: memref<128x128xbf16, #tpu.memory_space<vmem>>, %arg3: memref<1x128xf32, #tpu.memory_space<vmem>>, %arg4: memref<128x128xbf16, #tpu.memory_space<vmem>>, %arg5: memref<1x128xf32, #tpu.memory_space<vmem>>, %arg6: memref<1x128xbf16, #tpu.memory_space<vmem>>, %arg7: memref<1x1xf32, #tpu.memory_space<smem>>, %arg8: memref<1x1x16xf32, #tpu.memory_space<vmem>>) attributes {dimension_semantics = [#tpu.dimension_semantics<parallel>], iteration_bounds = array<i64: 1>, scalar_prefetch = 0 : i64, scratch_operands = 0 : i64, tpu.core_type = #tpu.core_type<tc>, window_params = [{transform_indices = @transform_0, window_bounds = array<i64: 16, 128>}, {pipeline_mode = #tpu.pipeline_mode<synchronous>, transform_indices = @transform_1, window_bounds = array<i64: 128, 128>}, {pipeline_mode = #tpu.pipeline_mode<synchronous>, transform_indices = @transform_2, window_bounds = array<i64: 1, 128>}, {pipeline_mode = #tpu.pipeline_mode<synchronous>, transform_indices = @transform_3, window_bounds = array<i64: 128, 128>}, {pipeline_mode = #tpu.pipeline_mode<synchronous>, transform_indices = @transform_4, window_bounds = array<i64: 1, 128>}, {pipeline_mode = #tpu.pipeline_mode<synchronous>, transform_indices = @transform_5, window_bounds = array<i64: 1, 128>}, {transform_indices = @transform_6, window_bounds = array<i64: 1, 1>}, {transform_indices = @transform_7, window_bounds = array<i64: 1, 1, 16>}]} {
    %c0 = arith.constant 0 : index
    %c0_0 = arith.constant 0 : index
    %0 = vector.load %arg1[%c0, %c0_0] : memref<16x128xbf16, #tpu.memory_space<vmem>>, vector<16x128xbf16>
    %c0_1 = arith.constant 0 : index
    %c0_2 = arith.constant 0 : index
    %1 = vector.load %arg2[%c0_1, %c0_2] : memref<128x128xbf16, #tpu.memory_space<vmem>>, vector<128x128xbf16>
    %cst = arith.constant dense<0.000000e+00> : vector<16x128xf32>
    %2 = tpu.matmul %0, %1, %cst {dimension_numbers = #tpu.dot_dimension_numbers<[1], [0], [0], [1], [0, 0, 1, 1], [], []>} : vector<16x128xbf16>, vector<128x128xbf16>, vector<16x128xf32> -> vector<16x128xf32>
    %c0_3 = arith.constant 0 : index
    %c0_4 = arith.constant 0 : index
    %3 = vector.load %arg3[%c0_3, %c0_4] : memref<1x128xf32, #tpu.memory_space<vmem>>, vector<1x128xf32>
    %4 = vector.broadcast %3 : vector<1x128xf32> to vector<16x128xf32>
    %5 = arith.addf %2, %4 : vector<16x128xf32>
    %cst_5 = arith.constant 0.000000e+00 : f32
    %6 = vector.broadcast %cst_5 : f32 to vector<16x128xf32>
    %7 = arith.maximumf %5, %6 : vector<16x128xf32>
    %8 = arith.truncf %7 : vector<16x128xf32> to vector<16x128xbf16>
    %c0_6 = arith.constant 0 : index
    %c0_7 = arith.constant 0 : index
    %9 = vector.load %arg4[%c0_6, %c0_7] : memref<128x128xbf16, #tpu.memory_space<vmem>>, vector<128x128xbf16>
    %cst_8 = arith.constant dense<0.000000e+00> : vector<16x128xf32>
    %10 = tpu.matmul %8, %9, %cst_8 {dimension_numbers = #tpu.dot_dimension_numbers<[1], [0], [0], [1], [0, 0, 1, 1], [], []>} : vector<16x128xbf16>, vector<128x128xbf16>, vector<16x128xf32> -> vector<16x128xf32>
    %c0_9 = arith.constant 0 : index
    %c0_10 = arith.constant 0 : index
    %11 = vector.load %arg5[%c0_9, %c0_10] : memref<1x128xf32, #tpu.memory_space<vmem>>, vector<1x128xf32>
    %12 = vector.broadcast %11 : vector<1x128xf32> to vector<16x128xf32>
    %13 = arith.addf %10, %12 : vector<16x128xf32>
    %cst_11 = arith.constant 0.000000e+00 : f32
    %14 = vector.broadcast %cst_11 : f32 to vector<16x128xf32>
    %15 = arith.maximumf %13, %14 : vector<16x128xf32>
    %c0_12 = arith.constant 0 : index
    %c0_13 = arith.constant 0 : index
    %16 = vector.load %arg6[%c0_12, %c0_13] : memref<1x128xbf16, #tpu.memory_space<vmem>>, vector<1x128xbf16>
    %17 = arith.truncf %15 : vector<16x128xf32> to vector<16x128xbf16>
    %cst_14 = arith.constant dense<0.000000e+00> : vector<1x16xf32>
    %18 = tpu.matmul %16, %17, %cst_14 {dimension_numbers = #tpu.dot_dimension_numbers<[1], [1], [0], [0], [0, 0, 1, 0], [], []>} : vector<1x128xbf16>, vector<16x128xbf16>, vector<1x16xf32> -> vector<1x16xf32>
    %c0_15 = arith.constant 0 : index
    %c0_16 = arith.constant 0 : index
    %19 = memref.load %arg7[%c0_15, %c0_16] : memref<1x1xf32, #tpu.memory_space<smem>>
    %20 = vector.broadcast %19 : f32 to vector<1x16xf32>
    %21 = arith.addf %18, %20 : vector<1x16xf32>
    %22 = math.absf %21 : vector<1x16xf32>
    %cst_17 = arith.constant 0.000000e+00 : f32
    %23 = vector.broadcast %cst_17 : f32 to vector<1x16xf32>
    %24 = arith.subf %23, %22 : vector<1x16xf32>
    %25 = math.exp %24 : vector<1x16xf32>
    %cst_18 = arith.constant 1.000000e+00 : f32
    %26 = vector.broadcast %cst_18 : f32 to vector<1x16xf32>
    %27 = arith.addf %26, %25 : vector<1x16xf32>
    %28 = tpu.reciprocal %27 : vector<1x16xf32> -> vector<1x16xf32>
    %cst_19 = arith.constant 0.000000e+00 : f32
    %29 = vector.broadcast %cst_19 : f32 to vector<1x16xf32>
    %30 = arith.cmpf oge, %21, %29 : vector<1x16xf32>
    %31 = arith.mulf %25, %28 : vector<1x16xf32>
    %32 = arith.select %30, %28, %31 : vector<1x16xi1>, vector<1x16xf32>
    %33 = vector.shape_cast %32 : vector<1x16xf32> to vector<1x1x16xf32>
    %c0_20 = arith.constant 0 : index
    %c0_21 = arith.constant 0 : index
    %c0_22 = arith.constant 0 : index
    %34 = vector.load %arg8[%c0_20, %c0_21, %c0_22] : memref<1x1x16xf32, #tpu.memory_space<vmem>>, vector<1x1x16xf32>
    tpu.vector_store %arg8[%c0_20, %c0_21, %c0_22], %33 {strides = array<i32>} : memref<1x1x16xf32, #tpu.memory_space<vmem>>, vector<1x1x16xf32>,
    return
  }
  func.func @transform_0(%arg0: i32) -> (i32, i32) {
    %c0_i32 = arith.constant 0 : i32
    %c0_i32_0 = arith.constant 0 : i32
    return %arg0, %c0_i32 : i32, i32
  }
  func.func @transform_1(%arg0: i32) -> (i32, i32) {
    %c0_i32 = arith.constant 0 : i32
    %c0_i32_0 = arith.constant 0 : i32
    %c0_i32_1 = arith.constant 0 : i32
    return %c0_i32, %c0_i32_0 : i32, i32
  }
  func.func @transform_2(%arg0: i32) -> (i32, i32) {
    %c0_i32 = arith.constant 0 : i32
    %c0_i32_0 = arith.constant 0 : i32
    %c0_i32_1 = arith.constant 0 : i32
    return %c0_i32, %c0_i32_0 : i32, i32
  }
  func.func @transform_3(%arg0: i32) -> (i32, i32) {
    %c0_i32 = arith.constant 0 : i32
    %c0_i32_0 = arith.constant 0 : i32
    %c0_i32_1 = arith.constant 0 : i32
    return %c0_i32, %c0_i32_0 : i32, i32
  }
  func.func @transform_4(%arg0: i32) -> (i32, i32) {
    %c0_i32 = arith.constant 0 : i32
    %c0_i32_0 = arith.constant 0 : i32
    %c0_i32_1 = arith.constant 0 : i32
    return %c0_i32, %c0_i32_0 : i32, i32
  }
  func.func @transform_5(%arg0: i32) -> (i32, i32) {
    %c0_i32 = arith.constant 0 : i32
    %c0_i32_0 = arith.constant 0 : i32
    %c0_i32_1 = arith.constant 0 : i32
    return %c0_i32, %c0_i32_0 : i32, i32
  }
  func.func @transform_6(%arg0: i32) -> (i32, i32) {
    %c0_i32 = arith.constant 0 : i32
    %c0_i32_0 = arith.constant 0 : i32
    %c0_i32_1 = arith.constant 0 : i32
    return %c0_i32, %c0_i32_0 : i32, i32
  }
  func.func @transform_7(%arg0: i32) -> (i32, i32, i32) {
    %c0_i32 = arith.constant 0 : i32
    %c0_i32_0 = arith.constant 0 : i32
    %c0_i32_1 = arith.constant 0 : i32
    return %arg0, %c0_i32, %c0_i32_0 : i32, i32, i32
  }
}

</mosaic_0001>

<llo_original>
// kernel: tpu_custom_call.1
$region0: #{tpu_custom_call.1}
  #allocation0 [shape = 'u32[]', space=smem, size = 0x4, offset = 0x4, fixed_abs, tag = 'smem constant byte address 0x4 - core index']
  #allocation1 [shape = 'u32[144,128]{1,0:T(1,128)}', space=vmem, size = 0x12000, scoped, tag = 'internal scratch']
  #allocation2 [shape = 'f32[1,1]{1,0:T(1,128)S(6)}', space=smem, size = 0x200, scoped, tag = 'scoped memory for tpu_custom_call.1']
  %s0 = inlined_call_operand.hbm [shape: bf16[16,128], index: 0, kind: input, shape index: {}]
  %s1 = inlined_call_operand.hbm [shape: bf16[128,128], index: 1, kind: input, shape index: {}]
  %s2 = inlined_call_operand.vmem [shape: f32[1,128], index: 2, kind: input, shape index: {}]
  %s3 = inlined_call_operand.hbm [shape: bf16[128,128], index: 3, kind: input, shape index: {}]
  %s4 = inlined_call_operand.vmem [shape: f32[1,128], index: 4, kind: input, shape index: {}]
  %s5 = inlined_call_operand.vmem [shape: bf16[1,128], index: 5, kind: input, shape index: {}]
  %s6 = inlined_call_operand.<no memory space> [shape: f32[1,1], index: 6, kind: input, shape index: {}]
  %s7 = inlined_call_operand.hbm [shape: f32[1,1,16], index: 7, kind: output, shape index: {}]
  %s8 = sld [smem:[#allocation0]]
  $region50: #{tpu_custom_call.1} parent=0
    _
  %s10 = ssub.s32 1, %s8
  %s11 = scalar_select 0, %s10, %s8
  %12 = sst [smem:[#allocation2]] %s6
  $region1: #{tpu_custom_call.1} parent=0
    #allocation3 [shape = 'u8[4096]{0}', space=vmem, size = 0x1000, scoped, tag = 'input window, operand 0, single buffered']
    #allocation4 [shape = 's32[1]{0}', space=sflag, size = 0x4, scoped, tag = 'scoped memory for tpu_custom_call.1']
    #allocation5 [shape = 's32[1]{0}', space=sflag, size = 0x4, scoped, tag = 'scoped memory for tpu_custom_call.1']
    #allocation6 [shape = 'u8[32768]{0}', space=vmem, size = 0x8000, scoped, tag = 'input window, operand 1, single buffered']
    #allocation7 [shape = 's32[1]{0}', space=sflag, size = 0x4, scoped, tag = 'scoped memory for tpu_custom_call.1']
    #allocation8 [shape = 'u8[32768]{0}', space=vmem, size = 0x8000, scoped, tag = 'input window, operand 3, single buffered']
    #allocation9 [shape = 'u8[512]{0}', space=vmem, size = 0x400, scoped, tag = 'output window, operand 0, single buffered']
    %13 = vsyncpa [#allocation4], 0
    %14 = vsyncpa [#allocation7], 0
    %15 = vsyncpa [#allocation5], 0
    // Predicated region
    $region2: #{tpu_custom_call.1} parent=1 // pred_check
      _
    $region3: #{tpu_custom_call.1} parent=1 // pred_check_branch
      %17 = sbr.rel (0) target = $region5
    $region4: #{tpu_custom_call.1} parent=1 // pred_region
      %s19 = ssub.s32 128, 128
      %20 = vsyncadd [#allocation4], %s19
      %s21 = sshll.u32 [#allocation3], 4
      %s22 = int_to_ptr.vmem [resolvable:$true] %s21
      %27 = dma.hbm_to_vmem [thread:$0]  %s0, 128, %s22, [#allocation4], 64, 64, 4
    $region5: #{tpu_custom_call.1} parent=1 // pred_fallthru
      _
    // Predicated region
    $region6: #{tpu_custom_call.1} parent=1 // pred_check
      _
    $region7: #{tpu_custom_call.1} parent=1 // pred_check_branch
      %29 = sbr.rel (0) target = $region9
    $region8: #{tpu_custom_call.1} parent=1 // pred_region
      %s31 = ssub.s32 1024, 1024
      %32 = vsyncadd [#allocation7], %s31
      %s33 = sshll.u32 [#allocation6], 4
      %s34 = int_to_ptr.vmem [resolvable:$true] %s33
      %39 = dma.hbm_to_vmem [thread:$0]  %s1, 1024, %s34, [#allocation7], 64, 64, 4
    $region9: #{tpu_custom_call.1} parent=1 // pred_fallthru
      _
    // Predicated region
    $region10: #{tpu_custom_call.1} parent=1 // pred_check
      _
    $region11: #{tpu_custom_call.1} parent=1 // pred_check_branch
      %41 = sbr.rel (0) target = $region13
    $region12: #{tpu_custom_call.1} parent=1 // pred_region
      _
    $region13: #{tpu_custom_call.1} parent=1 // pred_fallthru
      _
    // Predicated region
    $region14: #{tpu_custom_call.1} parent=1 // pred_check
      _
    $region15: #{tpu_custom_call.1} parent=1 // pred_check_branch
      %43 = sbr.rel (0) target = $region17
    $region16: #{tpu_custom_call.1} parent=1 // pred_region
      %s45 = ssub.s32 1024, 1024
      %46 = vsyncadd [#allocation7], %s45
      %s47 = sshll.u32 [#allocation8], 4
      %s48 = int_to_ptr.vmem [resolvable:$true] %s47
      %53 = dma.hbm_to_vmem [thread:$0]  %s3, 1024, %s48, [#allocation7], 64, 64, 4
    $region17: #{tpu_custom_call.1} parent=1 // pred_fallthru
      _
    // Predicated region
    $region18: #{tpu_custom_call.1} parent=1 // pred_check
      _
    $region19: #{tpu_custom_call.1} parent=1 // pred_check_branch
      %55 = sbr.rel (0) target = $region21
    $region20: #{tpu_custom_call.1} parent=1 // pred_region
      _
    $region21: #{tpu_custom_call.1} parent=1 // pred_fallthru
      _
    // Predicated region
    $region22: #{tpu_custom_call.1} parent=1 // pred_check
      _
    $region23: #{tpu_custom_call.1} parent=1 // pred_check_branch
      %57 = sbr.rel (0) target = $region25
    $region24: #{tpu_custom_call.1} parent=1 // pred_region
      _
    $region25: #{tpu_custom_call.1} parent=1 // pred_fallthru
      _
    // Predicated region
    $region26: #{tpu_custom_call.1} parent=1 // pred_check
      _
    $region27: #{tpu_custom_call.1} parent=1 // pred_check_branch
      %59 = sbr.rel (0) target = $region29
    $region28: #{tpu_custom_call.1} parent=1 // pred_region
      _
    $region29: #{tpu_custom_call.1} parent=1 // pred_fallthru
      _
    // Predicated region
    $region30: #{tpu_custom_call.1} parent=1 // pred_check
      _
    $region31: #{tpu_custom_call.1} parent=1 // pred_check_branch
      %61 = sbr.rel (0) target = $region33
    $region32: #{tpu_custom_call.1} parent=1 // pred_region
      %62 = dma.done [#allocation4], 128
    $region33: #{tpu_custom_call.1} parent=1 // pred_fallthru
      _
    // Predicated region
    $region34: #{tpu_custom_call.1} parent=1 // pred_check
      _
    $region35: #{tpu_custom_call.1} parent=1 // pred_check_branch
      %64 = sbr.rel (0) target = $region37
    $region36: #{tpu_custom_call.1} parent=1 // pred_region
      %65 = dma.done [#allocation7], 1024
    $region37: #{tpu_custom_call.1} parent=1 // pred_fallthru
      _
    // Predicated region
    $region38: #{tpu_custom_call.1} parent=1 // pred_check
      _
    $region39: #{tpu_custom_call.1} parent=1 // pred_check_branch
      %67 = sbr.rel (0) target = $region41
    $region40: #{tpu_custom_call.1} parent=1 // pred_region
      %68 = dma.done [#allocation7], 1024
    $region41: #{tpu_custom_call.1} parent=1 // pred_fallthru
      _
    %v70 = vld [vmem:[#allocation3] sm:$0xf]
    %v71 = vld [vmem:[#allocation3 + $0x4] sm:$0xf]
    %v72 = vld [vmem:[#allocation6] sm:$0xf]
    %v73 = vld [vmem:[#allocation6 + $0x4] sm:$0xf]
    %v74 = vld [vmem:[#allocation6 + $0x8] sm:$0xf]
    %v75 = vld [vmem:[#allocation6 + $0xc] sm:$0xf]
    %v76 = vld [vmem:[#allocation6 + $0x10] sm:$0xf]
    %v77 = vld [vmem:[#allocation6 + $0x14] sm:$0xf]
    %v78 = vld [vmem:[#allocation6 + $0x18] sm:$0xf]
    %v79 = vld [vmem:[#allocation6 + $0x1c] sm:$0xf]
    %v80 = vld [vmem:[#allocation6 + $0x20] sm:$0xf]
    %v81 = vld [vmem:[#allocation6 + $0x24] sm:$0xf]
    %v82 = vld [vmem:[#allocation6 + $0x28] sm:$0xf]
    %v83 = vld [vmem:[#allocation6 + $0x2c] sm:$0xf]
    %v84 = vld [vmem:[#allocation6 + $0x30] sm:$0xf]
    %v85 = vld [vmem:[#allocation6 + $0x34] sm:$0xf]
    %v86 = vld [vmem:[#allocation6 + $0x38] sm:$0xf]
    %v87 = vld [vmem:[#allocation6 + $0x3c] sm:$0xf]
    %v88 = vld [vmem:[%s2] sm:$0x1]
    %v90 = vlaneseq
    %v91 = vshrl.u32 %v90, 7
    %v92 = vsub.s32 0, %v91
    %v93 = vrot.slane %v88, %v92
    %v97 = vunpack.c.l.b16 %v70
    %v98 = vunpack.c.l.b16 %v71
    %v99 = vpack.c.b16 %v98, %v97
    %v117 = vunpack.c.l.b16 %v72
    %v118 = vunpack.c.l.b16 %v73
    %v119 = vunpack.c.l.b16 %v74
    %v120 = vunpack.c.l.b16 %v75
    %v121 = vunpack.c.l.b16 %v76
    %v122 = vunpack.c.l.b16 %v77
    %v123 = vunpack.c.l.b16 %v78
    %v124 = vunpack.c.l.b16 %v79
    %v125 = vunpack.c.l.b16 %v80
    %v126 = vunpack.c.l.b16 %v81
    %v127 = vunpack.c.l.b16 %v82
    %v128 = vunpack.c.l.b16 %v83
    %v129 = vunpack.c.l.b16 %v84
    %v130 = vunpack.c.l.b16 %v85
    %v131 = vunpack.c.l.b16 %v86
    %v132 = vunpack.c.l.b16 %v87
    %v133 = vpack.c.b16 %v118, %v117
    %v134 = vpack.c.b16 %v120, %v119
    %v135 = vpack.c.b16 %v122, %v121
    %v136 = vpack.c.b16 %v124, %v123
    %v137 = vpack.c.b16 %v126, %v125
    %v138 = vpack.c.b16 %v128, %v127
    %v139 = vpack.c.b16 %v130, %v129
    %v140 = vpack.c.b16 %v132, %v131
    %149 = vmatprep.subr.bf16.mxu0 0
    %150 = vmatpush1.bf16.msra.mxu0 %v140
    %151 = vmatprep.subr.bf16.mxu0 0
    %152 = vmatpush1.bf16.msra.mxu0 %v139
    %153 = vmatprep.subr.bf16.mxu0 0
    %154 = vmatpush1.bf16.msra.mxu0 %v138
    %155 = vmatprep.subr.bf16.mxu0 0
    %156 = vmatpush1.bf16.msra.mxu0 %v137
    %157 = vmatprep.subr.bf16.mxu0 0
    %158 = vmatpush1.bf16.msra.mxu0 %v136
    %159 = vmatprep.subr.bf16.mxu0 0
    %160 = vmatpush1.bf16.msra.mxu0 %v135
    %161 = vmatprep.subr.bf16.mxu0 0
    %162 = vmatpush1.bf16.msra.mxu0 %v134
    %163 = vmatprep.subr.bf16.mxu0 0
    %164 = vmatpush1.bf16.msra.mxu0 %v133
    %165 = vmatprep.subr.bf16.mxu0 0
    %166 = vmatpush2.bf16.msra.mxu0 0
    %167 = vmatprep.subr.bf16.mxu0 0
    %168 = vmatpush2.bf16.msra.mxu0 0
    %169 = vmatprep.subr.bf16.mxu0 0
    %170 = vmatpush2.bf16.msra.mxu0 0
    %171 = vmatprep.subr.bf16.mxu0 0
    %172 = vmatpush2.bf16.msra.mxu0 0
    %173 = vmatprep.subr.bf16.mxu0 0
    %174 = vmatpush2.bf16.msra.mxu0 0
    %175 = vmatprep.subr.bf16.mxu0 0
    %176 = vmatpush2.bf16.msra.mxu0 0
    %177 = vmatprep.subr.bf16.mxu0 0
    %178 = vmatpush2.bf16.msra.mxu0 0
    %179 = vmatprep.subr.bf16.mxu0 0
    %180 = vmatpush2.bf16.msra.mxu0 0
    %181 = vmatprep.mubr.bf16.mxu0 0
    %182 = vmatmul.mubr.bf16.gmra.mxu0 %v99
    %v183 = vpop.f32.mrf.mxu0
    %v184 = vadd.f32 %v93, %v183
    %v185 = vpop.f32.mrf.mxu0
    %v186 = vpop.f32.mrf.mxu0
    %v187 = vadd.f32 %v93, %v186
    %v188 = vpop.f32.mrf.mxu0
    %189 = vdwg.mxu0
    %v190 = vmax.f32 %v184, 0.0
    %v191 = vmax.f32 %v187, 0.0
    %v192 = vpack.c.bf16 %v191, %v190
    %v193 = vld [vmem:[#allocation8] sm:$0xf]
    %v194 = vld [vmem:[#allocation8 + $0x4] sm:$0xf]
    %v195 = vld [vmem:[#allocation8 + $0x8] sm:$0xf]
    %v196 = vld [vmem:[#allocation8 + $0xc] sm:$0xf]
    %v197 = vld [vmem:[#allocation8 + $0x10] sm:$0xf]
    %v198 = vld [vmem:[#allocation8 + $0x14] sm:$0xf]
    %v199 = vld [vmem:[#allocation8 + $0x18] sm:$0xf]
    %v200 = vld [vmem:[#allocation8 + $0x1c] sm:$0xf]
    %v201 = vld [vmem:[#allocation8 + $0x20] sm:$0xf]
    %v202 = vld [vmem:[#allocation8 + $0x24] sm:$0xf]
    %v203 = vld [vmem:[#allocation8 + $0x28] sm:$0xf]
    %v204 = vld [vmem:[#allocation8 + $0x2c] sm:$0xf]
    %v205 = vld [vmem:[#allocation8 + $0x30] sm:$0xf]
    %v206 = vld [vmem:[#allocation8 + $0x34] sm:$0xf]
    %v207 = vld [vmem:[#allocation8 + $0x38] sm:$0xf]
    %v208 = vld [vmem:[#allocation8 + $0x3c] sm:$0xf]
    %v209 = vld [vmem:[%s4] sm:$0x1]
    %v211 = vlaneseq
    %v212 = vshrl.u32 %v211, 7
    %v213 = vsub.s32 0, %v212
    %v214 = vrot.slane %v209, %v213
    %v232 = vunpack.c.l.b16 %v193
    %v233 = vunpack.c.l.b16 %v194
    %v234 = vunpack.c.l.b16 %v195
    %v235 = vunpack.c.l.b16 %v196
    %v236 = vunpack.c.l.b16 %v197
    %v237 = vunpack.c.l.b16 %v198
    %v238 = vunpack.c.l.b16 %v199
    %v239 = vunpack.c.l.b16 %v200
    %v240 = vunpack.c.l.b16 %v201
    %v241 = vunpack.c.l.b16 %v202
    %v242 = vunpack.c.l.b16 %v203
    %v243 = vunpack.c.l.b16 %v204
    %v244 = vunpack.c.l.b16 %v205
    %v245 = vunpack.c.l.b16 %v206
    %v246 = vunpack.c.l.b16 %v207
    %v247 = vunpack.c.l.b16 %v208
    %v248 = vpack.c.b16 %v233, %v232
    %v249 = vpack.c.b16 %v235, %v234
    %v250 = vpack.c.b16 %v237, %v236
    %v251 = vpack.c.b16 %v239, %v238
    %v252 = vpack.c.b16 %v241, %v240
    %v253 = vpack.c.b16 %v243, %v242
    %v254 = vpack.c.b16 %v245, %v244
    %v255 = vpack.c.b16 %v247, %v246
    %264 = vmatprep.subr.bf16.mxu0 0
    %265 = vmatpush1.bf16.msra.mxu0 %v255
    %266 = vmatprep.subr.bf16.mxu0 0
    %267 = vmatpush1.bf16.msra.mxu0 %v254
    %268 = vmatprep.subr.bf16.mxu0 0
    %269 = vmatpush1.bf16.msra.mxu0 %v253
    %270 = vmatprep.subr.bf16.mxu0 0
    %271 = vmatpush1.bf16.msra.mxu0 %v252
    %272 = vmatprep.subr.bf16.mxu0 0
    %273 = vmatpush1.bf16.msra.mxu0 %v251
    %274 = vmatprep.subr.bf16.mxu0 0
    %275 = vmatpush1.bf16.msra.mxu0 %v250
    %276 = vmatprep.subr.bf16.mxu0 0
    %277 = vmatpush1.bf16.msra.mxu0 %v249
    %278 = vmatprep.subr.bf16.mxu0 0
    %279 = vmatpush1.bf16.msra.mxu0 %v248
    %280 = vmatprep.subr.bf16.mxu0 0
    %281 = vmatpush2.bf16.msra.mxu0 0
    %282 = vmatprep.subr.bf16.mxu0 0
    %283 = vmatpush2.bf16.msra.mxu0 0
    %284 = vmatprep.subr.bf16.mxu0 0
    %285 = vmatpush2.bf16.msra.mxu0 0
    %286 = vmatprep.subr.bf16.mxu0 0
    %287 = vmatpush2.bf16.msra.mxu0 0
    %288 = vmatprep.subr.bf16.mxu0 0
    %289 = vmatpush2.bf16.msra.mxu0 0
    %290 = vmatprep.subr.bf16.mxu0 0
    %291 = vmatpush2.bf16.msra.mxu0 0
    %292 = vmatprep.subr.bf16.mxu0 0
    %293 = vmatpush2.bf16.msra.mxu0 0
    %294 = vmatprep.subr.bf16.mxu0 0
    %295 = vmatpush2.bf16.msra.mxu0 0
    %296 = vmatprep.mubr.bf16.mxu0 0
    %297 = vmatmul.mubr.bf16.gmra.mxu0 %v192
    %v298 = vpop.f32.mrf.mxu0
    %v299 = vadd.f32 %v214, %v298
    %v300 = vpop.f32.mrf.mxu0
    %v301 = vpop.f32.mrf.mxu0
    %v302 = vadd.f32 %v214, %v301
    %v303 = vpop.f32.mrf.mxu0
    %304 = vdwg.mxu0
    %v305 = vmax.f32 %v299, 0.0
    %v306 = vmax.f32 %v302, 0.0
    %v307 = vld [vmem:[%s5] sm:$0x1]
    %v308 = vpack.c.bf16 %v306, %v305
    %s309 = sld [smem:[#allocation2]]
    %v310 = vstv %s309
    %311 = vmatprep.subr.bf16.mxu0 0
    %312 = vmatpush1.bf16.xpose.msra.mxu0 0
    %313 = vmatprep.subr.bf16.mxu0 0
    %314 = vmatpush1.bf16.xpose.msra.mxu0 0
    %315 = vmatprep.subr.bf16.mxu0 0
    %316 = vmatpush1.bf16.xpose.msra.mxu0 0
    %317 = vmatprep.subr.bf16.mxu0 0
    %318 = vmatpush1.bf16.xpose.msra.mxu0 0
    %319 = vmatprep.subr.bf16.mxu0 0
    %320 = vmatpush1.bf16.xpose.msra.mxu0 0
    %321 = vmatprep.subr.bf16.mxu0 0
    %322 = vmatpush1.bf16.xpose.msra.mxu0 0
    %323 = vmatprep.subr.bf16.mxu0 0
    %324 = vmatpush1.bf16.xpose.msra.mxu0 0
    %325 = vmatprep.subr.bf16.mxu0 0
    %326 = vmatpush1.bf16.xpose.msra.mxu0 %v308
    %327 = vmatprep.subr.bf16.mxu0 0
    %328 = vmatpush2.bf16.xpose.msra.mxu0 0
    %329 = vmatprep.subr.bf16.mxu0 0
    %330 = vmatpush2.bf16.xpose.msra.mxu0 0
    %331 = vmatprep.subr.bf16.mxu0 0
    %332 = vmatpush2.bf16.xpose.msra.mxu0 0
    %333 = vmatprep.subr.bf16.mxu0 0
    %334 = vmatpush2.bf16.xpose.msra.mxu0 0
    %335 = vmatprep.subr.bf16.mxu0 0
    %336 = vmatpush2.bf16.xpose.msra.mxu0 0
    %337 = vmatprep.subr.bf16.mxu0 0
    %338 = vmatpush2.bf16.xpose.msra.mxu0 0
    %339 = vmatprep.subr.bf16.mxu0 0
    %340 = vmatpush2.bf16.xpose.msra.mxu0 0
    %341 = vmatprep.subr.bf16.mxu0 0
    %342 = vmatpush2.bf16.xpose.msra.mxu0 0
    %343 = vmatprep.mubr.bf16.mxu0 0
    %344 = vmatmul.mubr.bf16.gmra.mxu0 %v307
    %v345 = vpop.f32.mrf.mxu0
    %v346 = vadd.f32 %v310, %v345
    %v347 = vpop.f32.mrf.mxu0
    %v348 = vpop.f32.mrf.mxu0
    %v349 = vpop.f32.mrf.mxu0
    %350 = vdwg.mxu0
    %v351 = vand.u32 2147483647, %v346
    %v352 = vsub.f32 0.0, %v351
    %v353 = vmul.f32 %v352, 1.442695
    %v354 = vpow.pop %v353
    %v355 = vadd.f32 %v354, 1.0
    %v356 = vrcp.pop %v355
    %vm357 = vcmp.ge.f32.partialorder %v346, 0.0
    %v358 = vmul.f32 %v354, %v356
    %v359 = vsel %vm357, %v356, %v358
    %vm360 = vcmask 122880
    %361 = vst.msk [vmem:[#allocation9] sm:$0x1] %vm360, %v359
    // Predicated region
    $region42: #{tpu_custom_call.1} parent=1 // pred_check
      _
    $region43: #{tpu_custom_call.1} parent=1 // pred_check_branch
      %363 = sbr.rel (0) target = $region45
    $region44: #{tpu_custom_call.1} parent=1 // pred_region
      %s365 = ssub.s32 16, 16
      %366 = vsyncadd [#allocation5], %s365
      %s368 = sshll.u32 [#allocation9], 4
      %s369 = int_to_ptr.vmem [resolvable:$true] %s368
      %371 = dma.vmem_to_hbm [thread:$0]  %s369, 16, %s7, [#allocation5]
    $region45: #{tpu_custom_call.1} parent=1 // pred_fallthru
      _
    // Predicated region
    $region46: #{tpu_custom_call.1} parent=1 // pred_check
      _
    $region47: #{tpu_custom_call.1} parent=1 // pred_check_branch
      %373 = sbr.rel (0) target = $region49
    $region48: #{tpu_custom_call.1} parent=1 // pred_region
      %374 = dma.done [#allocation5], 16
    $region49: #{tpu_custom_call.1} parent=1 // pred_fallthru
      _
    %375 = vsyncpa [#allocation4], 1
    %376 = vsyncpa [#allocation7], 1
    %377 = vsyncpa [#allocation5], 1

// kernel: tpu_custom_call.1
$region0: #{tpu_custom_call.1}
  #allocation0 [shape = 'u32[]', space=smem, size = 0x4, offset = 0x4, fixed_abs, tag = 'smem constant byte address 0x4 - core index']
  #allocation1 [shape = 'u32[144,128]{1,0:T(1,128)}', space=vmem, size = 0x12000, scoped, tag = 'internal scratch']
  #allocation2 [shape = 'f32[1,1]{1,0:T(1,128)S(6)}', space=smem, size = 0x200, scoped, tag = 'scoped memory for tpu_custom_call.1']
  %s0 = inlined_call_operand.hbm [shape: bf16[16,128], index: 0, kind: input, shape index: {}]
  %s1 = inlined_call_operand.hbm [shape: bf16[128,128], index: 1, kind: input, shape index: {}]
  %s2 = inlined_call_operand.vmem [shape: f32[1,128], index: 2, kind: input, shape index: {}]
  %s3 = inlined_call_operand.hbm [shape: bf16[128,128], index: 3, kind: input, shape index: {}]
  %s4 = inlined_call_operand.vmem [shape: f32[1,128], index: 4, kind: input, shape index: {}]
  %s5 = inlined_call_operand.vmem [shape: bf16[1,128], index: 5, kind: input, shape index: {}]
  %s6 = inlined_call_operand.<no memory space> [shape: f32[1,1], index: 6, kind: input, shape index: {}]
  %s7 = inlined_call_operand.hbm [shape: f32[1,1,16], index: 7, kind: output, shape index: {}]
  %s8 = sld [smem:[#allocation0]]
  $region50: #{tpu_custom_call.1} parent=0
    _
  %s10 = ssub.s32 1, %s8
  %s11 = scalar_select 0, %s10, %s8
  %12 = sst [smem:[#allocation2]] %s6
  $region1: #{tpu_custom_call.1} parent=0
    #allocation3 [shape = 'u8[4096]{0}', space=vmem, size = 0x1000, scoped, tag = 'input window, operand 0, single buffered']
    #allocation4 [shape = 's32[1]{0}', space=sflag, size = 0x4, scoped, tag = 'scoped memory for tpu_custom_call.1']
    #allocation5 [shape = 's32[1]{0}', space=sflag, size = 0x4, scoped, tag = 'scoped memory for tpu_custom_call.1']
    #allocation6 [shape = 'u8[32768]{0}', space=vmem, size = 0x8000, scoped, tag = 'input window, operand 1, single buffered']
    #allocation7 [shape = 's32[1]{0}', space=sflag, size = 0x4, scoped, tag = 'scoped memory for tpu_custom_call.1']
    #allocation8 [shape = 'u8[32768]{0}', space=vmem, size = 0x8000, scoped, tag = 'input window, operand 3, single buffered']
    #allocation9 [shape = 'u8[512]{0}', space=vmem, size = 0x400, scoped, tag = 'output window, operand 0, single buffered']
    %13 = vsyncpa [#allocation4], 0
    %14 = vsyncpa [#allocation7], 0
    %15 = vsyncpa [#allocation5], 0
    // Predicated region
    $region2: #{tpu_custom_call.1} parent=1 // pred_check
      _
    $region3: #{tpu_custom_call.1} parent=1 // pred_check_branch
      %17 = sbr.rel (0) target = $region5
    $region4: #{tpu_custom_call.1} parent=1 // pred_region
      %s19 = ssub.s32 128, 128
      %20 = vsyncadd [#allocation4], %s19
      %s21 = sshll.u32 [#allocation3], 4
      %s22 = int_to_ptr.vmem [resolvable:$true] %s21
      %27 = dma.hbm_to_vmem [thread:$0]  %s0, 128, %s22, [#allocation4], 64, 64, 4
    $region5: #{tpu_custom_call.1} parent=1 // pred_fallthru
      _
    // Predicated region
    $region6: #{tpu_custom_call.1} parent=1 // pred_check
      _
    $region7: #{tpu_custom_call.1} parent=1 // pred_check_branch
      %29 = sbr.rel (0) target = $region9
    $region8: #{tpu_custom_call.1} parent=1 // pred_region
      %s31 = ssub.s32 1024, 1024
      %32 = vsyncadd [#allocation7], %s31
      %s33 = sshll.u32 [#allocation6], 4
      %s34 = int_to_ptr.vmem [resolvable:$true] %s33
      %39 = dma.hbm_to_vmem [thread:$0]  %s1, 1024, %s34, [#allocation7], 64, 64, 4
    $region9: #{tpu_custom_call.1} parent=1 // pred_fallthru
      _
    // Predicated region
    $region10: #{tpu_custom_call.1} parent=1 // pred_check
      _
    $region11: #{tpu_custom_call.1} parent=1 // pred_check_branch
      %41 = sbr.rel (0) target = $region13
    $region12: #{tpu_custom_call.1} parent=1 // pred_region
      _
    $region13: #{tpu_custom_call.1} parent=1 // pred_fallthru
      _
    // Predicated region
    $region14: #{tpu_custom_call.1} parent=1 // pred_check
      _
    $region15: #{tpu_custom_call.1} parent=1 // pred_check_branch
      %43 = sbr.rel (0) target = $region17
    $region16: #{tpu_custom_call.1} parent=1 // pred_region
      %s45 = ssub.s32 1024, 1024
      %46 = vsyncadd [#allocation7], %s45
      %s47 = sshll.u32 [#allocation8], 4
      %s48 = int_to_ptr.vmem [resolvable:$true] %s47
      %53 = dma.hbm_to_vmem [thread:$0]  %s3, 1024, %s48, [#allocation7], 64, 64, 4
    $region17: #{tpu_custom_call.1} parent=1 // pred_fallthru
      _
    // Predicated region
    $region18: #{tpu_custom_call.1} parent=1 // pred_check
      _
    $region19: #{tpu_custom_call.1} parent=1 // pred_check_branch
      %55 = sbr.rel (0) target = $region21
    $region20: #{tpu_custom_call.1} parent=1 // pred_region
      _
    $region21: #{tpu_custom_call.1} parent=1 // pred_fallthru
      _
    // Predicated region
    $region22: #{tpu_custom_call.1} parent=1 // pred_check
      _
    $region23: #{tpu_custom_call.1} parent=1 // pred_check_branch
      %57 = sbr.rel (0) target = $region25
    $region24: #{tpu_custom_call.1} parent=1 // pred_region
      _
    $region25: #{tpu_custom_call.1} parent=1 // pred_fallthru
      _
    // Predicated region
    $region26: #{tpu_custom_call.1} parent=1 // pred_check
      _
    $region27: #{tpu_custom_call.1} parent=1 // pred_check_branch
      %59 = sbr.rel (0) target = $region29
    $region28: #{tpu_custom_call.1} parent=1 // pred_region
      _
    $region29: #{tpu_custom_call.1} parent=1 // pred_fallthru
      _
    // Predicated region
    $region30: #{tpu_custom_call.1} parent=1 // pred_check
      _
    $region31: #{tpu_custom_call.1} parent=1 // pred_check_branch
      %61 = sbr.rel (0) target = $region33
    $region32: #{tpu_custom_call.1} parent=1 // pred_region
      %62 = dma.done [#allocation4], 128
    $region33: #{tpu_custom_call.1} parent=1 // pred_fallthru
      _
    // Predicated region
    $region34: #{tpu_custom_call.1} parent=1 // pred_check
      _
    $region35: #{tpu_custom_call.1} parent=1 // pred_check_branch
      %64 = sbr.rel (0) target = $region37
    $region36: #{tpu_custom_call.1} parent=1 // pred_region
      %65 = dma.done [#allocation7], 1024
    $region37: #{tpu_custom_call.1} parent=1 // pred_fallthru
      _
    // Predicated region
    $region38: #{tpu_custom_call.1} parent=1 // pred_check
      _
    $region39: #{tpu_custom_call.1} parent=1 // pred_check_branch
      %67 = sbr.rel (0) target = $region41
    $region40: #{tpu_custom_call.1} parent=1 // pred_region
      %68 = dma.done [#allocation7], 1024
    $region41: #{tpu_custom_call.1} parent=1 // pred_fallthru
      _
    %v70 = vld [vmem:[#allocation3] sm:$0xf]
    %v71 = vld [vmem:[#allocation3 + $0x4] sm:$0xf]
    %v72 = vld [vmem:[#allocation6] sm:$0xf]
    %v73 = vld [vmem:[#allocation6 + $0x4] sm:$0xf]
    %v74 = vld [vmem:[#allocation6 + $0x8] sm:$0xf]
    %v75 = vld [vmem:[#allocation6 + $0xc] sm:$0xf]
    %v76 = vld [vmem:[#allocation6 + $0x10] sm:$0xf]
    %v77 = vld [vmem:[#allocation6 + $0x14] sm:$0xf]
    %v78 = vld [vmem:[#allocation6 + $0x18] sm:$0xf]
    %v79 = vld [vmem:[#allocation6 + $0x1c] sm:$0xf]
    %v80 = vld [vmem:[#allocation6 + $0x20] sm:$0xf]
    %v81 = vld [vmem:[#allocation6 + $0x24] sm:$0xf]
    %v82 = vld [vmem:[#allocation6 + $0x28] sm:$0xf]
    %v83 = vld [vmem:[#allocation6 + $0x2c] sm:$0xf]
    %v84 = vld [vmem:[#allocation6 + $0x30] sm:$0xf]
    %v85 = vld [vmem:[#allocation6 + $0x34] sm:$0xf]
    %v86 = vld [vmem:[#allocation6 + $0x38] sm:$0xf]
    %v87 = vld [vmem:[#allocation6 + $0x3c] sm:$0xf]
    %v88 = vld [vmem:[%s2] sm:$0x1]
    %v90 = vlaneseq
    %v91 = vshrl.u32 %v90, 7
    %v92 = vsub.s32 0, %v91
    %v93 = vrot.slane %v88, %v92
    %v97 = vunpack.c.l.b16 %v70
    %v98 = vunpack.c.l.b16 %v71
    %v99 = vpack.c.b16 %v98, %v97
    %v117 = vunpack.c.l.b16 %v72
    %v118 = vunpack.c.l.b16 %v73
    %v119 = vunpack.c.l.b16 %v74
    %v120 = vunpack.c.l.b16 %v75
    %v121 = vunpack.c.l.b16 %v76
    %v122 = vunpack.c.l.b16 %v77
    %v123 = vunpack.c.l.b16 %v78
    %v124 = vunpack.c.l.b16 %v79
    %v125 = vunpack.c.l.b16 %v80
    %v126 = vunpack.c.l.b16 %v81
    %v127 = vunpack.c.l.b16 %v82
    %v128 = vunpack.c.l.b16 %v83
    %v129 = vunpack.c.l.b16 %v84
    %v130 = vunpack.c.l.b16 %v85
    %v131 = vunpack.c.l.b16 %v86
    %v132 = vunpack.c.l.b16 %v87
    %v133 = vpack.c.b16 %v118, %v117
    %v134 = vpack.c.b16 %v120, %v119
    %v135 = vpack.c.b16 %v122, %v121
    %v136 = vpack.c.b16 %v124, %v123
    %v137 = vpack.c.b16 %v126, %v125
    %v138 = vpack.c.b16 %v128, %v127
    %v139 = vpack.c.b16 %v130, %v129
    %v140 = vpack.c.b16 %v132, %v131
    %149 = vmatprep.subr.bf16.mxu0 0
    %150 = vmatpush1.bf16.msra.mxu0 %v140
    %151 = vmatprep.subr.bf16.mxu0 0
    %152 = vmatpush1.bf16.msra.mxu0 %v139
    %153 = vmatprep.subr.bf16.mxu0 0
    %154 = vmatpush1.bf16.msra.mxu0 %v138
    %155 = vmatprep.subr.bf16.mxu0 0
    %156 = vmatpush1.bf16.msra.mxu0 %v137
    %157 = vmatprep.subr.bf16.mxu0 0
    %158 = vmatpush1.bf16.msra.mxu0 %v136
    %159 = vmatprep.subr.bf16.mxu0 0
    %160 = vmatpush1.bf16.msra.mxu0 %v135
    %161 = vmatprep.subr.bf16.mxu0 0
    %162 = vmatpush1.bf16.msra.mxu0 %v134
    %163 = vmatprep.subr.bf16.mxu0 0
    %164 = vmatpush1.bf16.msra.mxu0 %v133
    %165 = vmatprep.subr.bf16.mxu0 0
    %166 = vmatpush2.bf16.msra.mxu0 0
    %167 = vmatprep.subr.bf16.mxu0 0
    %168 = vmatpush2.bf16.msra.mxu0 0
    %169 = vmatprep.subr.bf16.mxu0 0
    %170 = vmatpush2.bf16.msra.mxu0 0
    %171 = vmatprep.subr.bf16.mxu0 0
    %172 = vmatpush2.bf16.msra.mxu0 0
    %173 = vmatprep.subr.bf16.mxu0 0
    %174 = vmatpush2.bf16.msra.mxu0 0
    %175 = vmatprep.subr.bf16.mxu0 0
    %176 = vmatpush2.bf16.msra.mxu0 0
    %177 = vmatprep.subr.bf16.mxu0 0
    %178 = vmatpush2.bf16.msra.mxu0 0
    %179 = vmatprep.subr.bf16.mxu0 0
    %180 = vmatpush2.bf16.msra.mxu0 0
    %181 = vmatprep.mubr.bf16.mxu0 0
    %182 = vmatmul.mubr.bf16.gmra.mxu0 %v99
    %v183 = vpop.f32.mrf.mxu0
    %v184 = vadd.f32 %v93, %v183
    %v185 = vpop.f32.mrf.mxu0
    %v186 = vpop.f32.mrf.mxu0
    %v187 = vadd.f32 %v93, %v186
    %v188 = vpop.f32.mrf.mxu0
    %189 = vdwg.mxu0
    %v190 = vmax.f32 %v184, 0.0
    %v191 = vmax.f32 %v187, 0.0
    %v192 = vpack.c.bf16 %v191, %v190
    %v193 = vld [vmem:[#allocation8] sm:$0xf]
    %v194 = vld [vmem:[#allocation8 + $0x4] sm:$0xf]
    %v195 = vld [vmem:[#allocation8 + $0x8] sm:$0xf]
    %v196 = vld [vmem:[#allocation8 + $0xc] sm:$0xf]
    %v197 = vld [vmem:[#allocation8 + $0x10] sm:$0xf]
    %v198 = vld [vmem:[#allocation8 + $0x14] sm:$0xf]
    %v199 = vld [vmem:[#allocation8 + $0x18] sm:$0xf]
    %v200 = vld [vmem:[#allocation8 + $0x1c] sm:$0xf]
    %v201 = vld [vmem:[#allocation8 + $0x20] sm:$0xf]
    %v202 = vld [vmem:[#allocation8 + $0x24] sm:$0xf]
    %v203 = vld [vmem:[#allocation8 + $0x28] sm:$0xf]
    %v204 = vld [vmem:[#allocation8 + $0x2c] sm:$0xf]
    %v205 = vld [vmem:[#allocation8 + $0x30] sm:$0xf]
    %v206 = vld [vmem:[#allocation8 + $0x34] sm:$0xf]
    %v207 = vld [vmem:[#allocation8 + $0x38] sm:$0xf]
    %v208 = vld [vmem:[#allocation8 + $0x3c] sm:$0xf]
    %v209 = vld [vmem:[%s4] sm:$0x1]
    %v211 = vlaneseq
    %v212 = vshrl.u32 %v211, 7
    %v213 = vsub.s32 0, %v212
    %v214 = vrot.slane %v209, %v213
    %v232 = vunpack.c.l.b16 %v193
    %v233 = vunpack.c.l.b16 %v194
    %v234 = vunpack.c.l.b16 %v195
    %v235 = vunpack.c.l.b16 %v196
    %v236 = vunpack.c.l.b16 %v197
    %v237 = vunpack.c.l.b16 %v198
    %v238 = vunpack.c.l.b16 %v199
    %v239 = vunpack.c.l.b16 %v200
    %v240 = vunpack.c.l.b16 %v201
    %v241 = vunpack.c.l.b16 %v202
    %v242 = vunpack.c.l.b16 %v203
    %v243 = vunpack.c.l.b16 %v204
    %v244 = vunpack.c.l.b16 %v205
    %v245 = vunpack.c.l.b16 %v206
    %v246 = vunpack.c.l.b16 %v207
    %v247 = vunpack.c.l.b16 %v208
    %v248 = vpack.c.b16 %v233, %v232
    %v249 = vpack.c.b16 %v235, %v234
    %v250 = vpack.c.b16 %v237, %v236
    %v251 = vpack.c.b16 %v239, %v238
    %v252 = vpack.c.b16 %v241, %v240
    %v253 = vpack.c.b16 %v243, %v242
    %v254 = vpack.c.b16 %v245, %v244
    %v255 = vpack.c.b16 %v247, %v246
    %264 = vmatprep.subr.bf16.mxu0 0
    %265 = vmatpush1.bf16.msra.mxu0 %v255
    %266 = vmatprep.subr.bf16.mxu0 0
    %267 = vmatpush1.bf16.msra.mxu0 %v254
    %268 = vmatprep.subr.bf16.mxu0 0
    %269 = vmatpush1.bf16.msra.mxu0 %v253
    %270 = vmatprep.subr.bf16.mxu0 0
    %271 = vmatpush1.bf16.msra.mxu0 %v252
    %272 = vmatprep.subr.bf16.mxu0 0
    %273 = vmatpush1.bf16.msra.mxu0 %v251
    %274 = vmatprep.subr.bf16.mxu0 0
    %275 = vmatpush1.bf16.msra.mxu0 %v250
    %276 = vmatprep.subr.bf16.mxu0 0
    %277 = vmatpush1.bf16.msra.mxu0 %v249
    %278 = vmatprep.subr.bf16.mxu0 0
    %279 = vmatpush1.bf16.msra.mxu0 %v248
    %280 = vmatprep.subr.bf16.mxu0 0
    %281 = vmatpush2.bf16.msra.mxu0 0
    %282 = vmatprep.subr.bf16.mxu0 0
    %283 = vmatpush2.bf16.msra.mxu0 0
    %284 = vmatprep.subr.bf16.mxu0 0
    %285 = vmatpush2.bf16.msra.mxu0 0
    %286 = vmatprep.subr.bf16.mxu0 0
    %287 = vmatpush2.bf16.msra.mxu0 0
    %288 = vmatprep.subr.bf16.mxu0 0
    %289 = vmatpush2.bf16.msra.mxu0 0
    %290 = vmatprep.subr.bf16.mxu0 0
    %291 = vmatpush2.bf16.msra.mxu0 0
    %292 = vmatprep.subr.bf16.mxu0 0
    %293 = vmatpush2.bf16.msra.mxu0 0
    %294 = vmatprep.subr.bf16.mxu0 0
    %295 = vmatpush2.bf16.msra.mxu0 0
    %296 = vmatprep.mubr.bf16.mxu0 0
    %297 = vmatmul.mubr.bf16.gmra.mxu0 %v192
    %v298 = vpop.f32.mrf.mxu0
    %v299 = vadd.f32 %v214, %v298
    %v300 = vpop.f32.mrf.mxu0
    %v301 = vpop.f32.mrf.mxu0
    %v302 = vadd.f32 %v214, %v301
    %v303 = vpop.f32.mrf.mxu0
    %304 = vdwg.mxu0
    %v305 = vmax.f32 %v299, 0.0
    %v306 = vmax.f32 %v302, 0.0
    %v307 = vld [vmem:[%s5] sm:$0x1]
    %v308 = vpack.c.bf16 %v306, %v305
    %s309 = sld [smem:[#allocation2]]
    %v310 = vstv %s309
    %311 = vmatprep.subr.bf16.mxu0 0
    %312 = vmatpush1.bf16.xpose.msra.mxu0 0
    %313 = vmatprep.subr.bf16.mxu0 0
    %314 = vmatpush1.bf16.xpose.msra.mxu0 0
    %315 = vmatprep.subr.bf16.mxu0 0
    %316 = vmatpush1.bf16.xpose.msra.mxu0 0
    %317 = vmatprep.subr.bf16.mxu0 0
    %318 = vmatpush1.bf16.xpose.msra.mxu0 0
    %319 = vmatprep.subr.bf16.mxu0 0
    %320 = vmatpush1.bf16.xpose.msra.mxu0 0
    %321 = vmatprep.subr.bf16.mxu0 0
    %322 = vmatpush1.bf16.xpose.msra.mxu0 0
    %323 = vmatprep.subr.bf16.mxu0 0
    %324 = vmatpush1.bf16.xpose.msra.mxu0 0
    %325 = vmatprep.subr.bf16.mxu0 0
    %326 = vmatpush1.bf16.xpose.msra.mxu0 %v308
    %327 = vmatprep.subr.bf16.mxu0 0
    %328 = vmatpush2.bf16.xpose.msra.mxu0 0
    %329 = vmatprep.subr.bf16.mxu0 0
    %330 = vmatpush2.bf16.xpose.msra.mxu0 0
    %331 = vmatprep.subr.bf16.mxu0 0
    %332 = vmatpush2.bf16.xpose.msra.mxu0 0
    %333 = vmatprep.subr.bf16.mxu0 0
    %334 = vmatpush2.bf16.xpose.msra.mxu0 0
    %335 = vmatprep.subr.bf16.mxu0 0
    %336 = vmatpush2.bf16.xpose.msra.mxu0 0
    %337 = vmatprep.subr.bf16.mxu0 0
    %338 = vmatpush2.bf16.xpose.msra.mxu0 0
    %339 = vmatprep.subr.bf16.mxu0 0
    %340 = vmatpush2.bf16.xpose.msra.mxu0 0
    %341 = vmatprep.subr.bf16.mxu0 0
    %342 = vmatpush2.bf16.xpose.msra.mxu0 0
    %343 = vmatprep.mubr.bf16.mxu0 0
    %344 = vmatmul.mubr.bf16.gmra.mxu0 %v307
    %v345 = vpop.f32.mrf.mxu0
    %v346 = vadd.f32 %v310, %v345
    %v347 = vpop.f32.mrf.mxu0
    %v348 = vpop.f32.mrf.mxu0
    %v349 = vpop.f32.mrf.mxu0
    %350 = vdwg.mxu0
    %v351 = vand.u32 2147483647, %v346
    %v352 = vsub.f32 0.0, %v351
    %v353 = vmul.f32 %v352, 1.442695
    %v354 = vpow.pop %v353
    %v355 = vadd.f32 %v354, 1.0
    %v356 = vrcp.pop %v355
    %vm357 = vcmp.ge.f32.partialorder %v346, 0.0
    %v358 = vmul.f32 %v354, %v356
    %v359 = vsel %vm357, %v356, %v358
    %vm360 = vcmask 122880
    %361 = vst.msk [vmem:[#allocation9] sm:$0x1] %vm360, %v359
    // Predicated region
    $region42: #{tpu_custom_call.1} parent=1 // pred_check
      _
    $region43: #{tpu_custom_call.1} parent=1 // pred_check_branch
      %363 = sbr.rel (0) target = $region45
    $region44: #{tpu_custom_call.1} parent=1 // pred_region
      %s365 = ssub.s32 16, 16
      %366 = vsyncadd [#allocation5], %s365
      %s368 = sshll.u32 [#allocation9], 4
      %s369 = int_to_ptr.vmem [resolvable:$true] %s368
      %371 = dma.vmem_to_hbm [thread:$0]  %s369, 16, %s7, [#allocation5]
    $region45: #{tpu_custom_call.1} parent=1 // pred_fallthru
      _
    // Predicated region
    $region46: #{tpu_custom_call.1} parent=1 // pred_check
      _
    $region47: #{tpu_custom_call.1} parent=1 // pred_check_branch
      %373 = sbr.rel (0) target = $region49
    $region48: #{tpu_custom_call.1} parent=1 // pred_region
      %374 = dma.done [#allocation5], 16
    $region49: #{tpu_custom_call.1} parent=1 // pred_fallthru
      _
    %375 = vsyncpa [#allocation4], 1
    %376 = vsyncpa [#allocation7], 1
    %377 = vsyncpa [#allocation5], 1

</llo_original>
